<compile_context>
chip_gen: v7x
topology: tpu7x:2x2x1
jax: 0.10.0
libtpu: 0.0.40
codegen_flags: <defaults>
</compile_context>

<pallas_src>
import functools

import jax
import jax.numpy as jnp
from jax.experimental import pallas as pl
from jax.experimental.pallas import tpu as pltpu


def _round_up(n: int, m: int) -> int:
    return (n + m - 1) // m * m


def _snn_step_kernel(x_ref, w1_ref, w2_ref, v1_init_ref, v2_init_ref,
                     spk_ref, v1_ref, v2_ref,
                     *, a, d, vth1, vth2, v_reset):
    """One fused SNN timestep.  Membrane state lives in the VMEM-resident
    output blocks v1_ref / v2_ref (constant index_map) across the T grid."""
    t = pl.program_id(0)

    # Load the initial membrane state exactly once.
    @pl.when(t == 0)
    def _():
        v1_ref[...] = v1_init_ref[...]
        v2_ref[...] = v2_init_ref[...]

    # ---- linear1 on the MXU (bf16 operands, f32 accumulate) ---------------
    h = jnp.dot(x_ref[0], w1_ref[...], preferred_element_type=jnp.float32)

    # ---- LIF neuron 1 (f32 VPU math): v = d*v + a*h, spike, hard reset ----
    v1 = d * v1_ref[...] + a * h
    s1 = v1 > vth1
    v1_ref[...] = jnp.where(s1, v_reset, v1)

    # ---- linear2 on the MXU (spikes are exact 0/1 -> bf16 lossless) -------
    o = jnp.dot(s1.astype(jnp.bfloat16), w2_ref[...],
                preferred_element_type=jnp.float32)

    # ---- LIF neuron 2 (threshold = 20 * Vth) -------------------------------
    v2 = d * v2_ref[...] + a * o
    s2 = v2 > vth2
    v2_ref[...] = jnp.where(s2, v_reset, v2)

    spk_ref[0] = s2.astype(jnp.float32)


@functools.partial(jax.jit,
                   static_argnames=("Rd", "Cm", "Rs", "Vth", "V_reset", "dt"))
def three_layer_snn_forward(x_seq, w1, w2, v1, v2, *,
                            Rd, Cm, Rs, Vth, V_reset, dt):
    """Run T fused timesteps of Three_Layer_SNN in one pallas_call.

    x_seq: (T, B, dim_in) f32 input per step.
    w1:    (dim_in, dim_h) f32, w2: (dim_h, dim_out) f32.
    v1:    (B, dim_h) f32, v2: (B, dim_out) f32 initial membrane potentials.
    Returns (spikes (T, B, dim_out) f32, v1_final, v2_final).  For T == 1 this
    equals a single PyTorch forward: (spike2, v2) plus the updated v1 state.
    """
    T, B, dim_in = x_seq.shape
    dim_h = w1.shape[1]
    dim_out = w2.shape[1]

    # Pre-fold LIF constants: v += (tau_in*inj - tau_lk*v)*dt == d*v + a*inj.
    tau_in = 1.0 / (Cm * Rs)
    tau_lk = (1.0 / Cm) * (1.0 / Rd + 1.0 / Rs)
    a = tau_in * dt
    d = 1.0 - tau_lk * dt

    # Lane-dense padding (last dims -> multiples of 128).  Zero-padded
    # columns/rows never influence the un-padded outputs (exact).
    in_p = _round_up(dim_in, 128)
    h_p = _round_up(dim_h, 128)
    out_p = _round_up(dim_out, 128)

    xp = jnp.pad(x_seq, ((0, 0), (0, 0), (0, in_p - dim_in))).astype(jnp.bfloat16)
    w1p = jnp.pad(w1, ((0, in_p - dim_in), (0, h_p - dim_h))).astype(jnp.bfloat16)
    w2p = jnp.pad(w2, ((0, h_p - dim_h), (0, out_p - dim_out))).astype(jnp.bfloat16)
    v1p = jnp.pad(v1, ((0, 0), (0, h_p - dim_h)), constant_values=V_reset)
    v2p = jnp.pad(v2, ((0, 0), (0, out_p - dim_out)), constant_values=V_reset)

    kernel = functools.partial(
        _snn_step_kernel, a=a, d=d, vth1=Vth, vth2=Vth * 20.0, v_reset=V_reset)

    grid_spec = pltpu.PrefetchScalarGridSpec(
        num_scalar_prefetch=0,
        grid=(T,),
        in_specs=[
            pl.BlockSpec((1, B, in_p), lambda t: (t, 0, 0)),   # x_t, per step
            pl.BlockSpec((in_p, h_p), lambda t: (0, 0)),       # W1, resident
            pl.BlockSpec((h_p, out_p), lambda t: (0, 0)),      # W2, resident
            pl.BlockSpec((B, h_p), lambda t: (0, 0)),          # v1 init
            pl.BlockSpec((B, out_p), lambda t: (0, 0)),        # v2 init
        ],
        out_specs=[
            pl.BlockSpec((1, B, out_p), lambda t: (t, 0, 0)),  # spike2 per step
            pl.BlockSpec((B, h_p), lambda t: (0, 0)),          # v1 final
            pl.BlockSpec((B, out_p), lambda t: (0, 0)),        # v2 final
        ],
    )

    spikes, v1f, v2f = pl.pallas_call(
        kernel,
        grid_spec=grid_spec,
        out_shape=(
            jax.ShapeDtypeStruct((T, B, out_p), jnp.float32),
            jax.ShapeDtypeStruct((B, h_p), jnp.float32),
            jax.ShapeDtypeStruct((B, out_p), jnp.float32),
        ),
        # Membrane state updates its own HBM buffer in place (no extra copy).
        input_output_aliases={3: 1, 4: 2},
        compiler_params=pltpu.CompilerParams(
            dimension_semantics=("arbitrary",)),   # state carries across T
    )(xp, w1p, w2p, v1p, v2p)

    # TODO(synk): for large batches add a leading "parallel" batch grid axis
    # (engages the 2nd TensorCore on v7x) and re-derive tiles vs 64 MiB VMEM.
    return spikes[..., :dim_out], v1f[:, :dim_h], v2f[:, :dim_out]


def _reference(x_seq, w1, w2, v1, v2, *, Rd, Cm, Rs, Vth, V_reset, dt):
    """Pure-JAX reference mirroring the kernel semantics (bf16 matmuls,
    f32 state), i.e. T repeated calls of the PyTorch forward."""
    a = (1.0 / (Cm * Rs)) * dt
    d = 1.0 - (1.0 / Cm) * (1.0 / Rd + 1.0 / Rs) * dt
    w1b = w1.astype(jnp.bfloat16)
    w2b = w2.astype(jnp.bfloat16)
    spikes = []
    for t in range(x_seq.shape[0]):
        h = jnp.dot(x_seq[t].astype(jnp.bfloat16), w1b,
                    preferred_element_type=jnp.float32)
        v1 = d * v1 + a * h
        s1 = v1 > Vth
        v1 = jnp.where(s1, V_reset, v1)
        o = jnp.dot(s1.astype(jnp.bfloat16), w2b,
                    preferred_element_type=jnp.float32)
        v2 = d * v2 + a * o
        s2 = v2 > Vth * 20.0
        v2 = jnp.where(s2, V_reset, v2)
        spikes.append(s2.astype(jnp.float32))
    return jnp.stack(spikes), v1, v2


if __name__ == "__main__":
    # Model hyper-parameters (the `param` dict of Three_Layer_SNN.__init__)
    param = dict(
        dim_in=16, dim_h=32, dim_out=8,
        W_std1=0.5, W_std2=6.0,
        Rd=1.0, Cm=1.0, Rs=1.0,
        Vth=0.5, V_reset=0.0, dt=0.1,
    )
    T, B = 8, 2   # 8 fused timesteps, batch of 2

    key = jax.random.PRNGKey(0)
    kx, k1, k2 = jax.random.split(key, 3)

    x_seq = jax.random.normal(kx, (T, B, param["dim_in"]), dtype=jnp.float32)
    w1 = param["W_std1"] * jax.random.normal(
        k1, (param["dim_in"], param["dim_h"]), dtype=jnp.float32)
    w2 = param["W_std2"] * jax.random.normal(
        k2, (param["dim_h"], param["dim_out"]), dtype=jnp.float32)

    # Membrane potentials after reset_(batch_size): filled with V_reset
    v1 = jnp.full((B, param["dim_h"]), param["V_reset"], dtype=jnp.float32)
    v2 = jnp.full((B, param["dim_out"]), param["V_reset"], dtype=jnp.float32)

    neuron_kwargs = dict(Rd=param["Rd"], Cm=param["Cm"], Rs=param["Rs"],
                         Vth=param["Vth"], V_reset=param["V_reset"],
                         dt=param["dt"])

    # Reference first (the kernel call aliases/donates its state inputs).
    ref_spk, ref_v1, ref_v2 = _reference(x_seq, w1, w2, v1, v2, **neuron_kwargs)

    spikes, v1_out, v2_out = three_layer_snn_forward(
        x_seq, w1, w2, v1, v2, **neuron_kwargs)
    jax.block_until_ready((spikes, v1_out, v2_out))

    assert spikes.shape == (T, B, param["dim_out"])
    assert v1_out.shape == (B, param["dim_h"])
    assert v2_out.shape == (B, param["dim_out"])
    assert jnp.allclose(spikes, ref_spk, atol=1e-4), "spike mismatch"
    assert jnp.allclose(v1_out, ref_v1, atol=1e-4), "v1 mismatch"
    assert jnp.allclose(v2_out, ref_v2, atol=1e-4), "v2 mismatch"

    print("KERNEL_OK")
</pallas_src>

<mosaic_0001>
module attributes {stable_mosaic.version = 11 : i64} {
  func.func @_snn_step_kernel(%arg0: i32, %arg1: memref<1x2x128xbf16, #tpu.memory_space<vmem>>, %arg2: memref<128x128xbf16, #tpu.memory_space<vmem>>, %arg3: memref<128x128xbf16, #tpu.memory_space<vmem>>, %arg4: memref<2x128xf32, #tpu.memory_space<vmem>>, %arg5: memref<2x128xf32, #tpu.memory_space<vmem>>, %arg6: memref<1x2x128xf32, #tpu.memory_space<vmem>>, %arg7: memref<2x128xf32, #tpu.memory_space<vmem>>, %arg8: memref<2x128xf32, #tpu.memory_space<vmem>>) attributes {dimension_semantics = [#tpu.dimension_semantics<arbitrary>], iteration_bounds = array<i64: 8>, scalar_prefetch = 0 : i64, scratch_operands = 0 : i64, tpu.core_type = #tpu.core_type<tc>, window_params = [{transform_indices = @transform_0, window_bounds = array<i64: 1, 2, 128>}, {pipeline_mode = #tpu.pipeline_mode<synchronous>, transform_indices = @transform_1, window_bounds = array<i64: 128, 128>}, {pipeline_mode = #tpu.pipeline_mode<synchronous>, transform_indices = @transform_2, window_bounds = array<i64: 128, 128>}, {pipeline_mode = #tpu.pipeline_mode<synchronous>, transform_indices = @transform_3, window_bounds = array<i64: 2, 128>}, {pipeline_mode = #tpu.pipeline_mode<synchronous>, transform_indices = @transform_4, window_bounds = array<i64: 2, 128>}, {transform_indices = @transform_5, window_bounds = array<i64: 1, 2, 128>}, {pipeline_mode = #tpu.pipeline_mode<synchronous>, transform_indices = @transform_6, window_bounds = array<i64: 2, 128>}, {pipeline_mode = #tpu.pipeline_mode<synchronous>, transform_indices = @transform_7, window_bounds = array<i64: 2, 128>}]} {
    %c0_i32 = arith.constant 0 : i32
    %0 = arith.cmpi eq, %arg0, %c0_i32 : i32
    %1 = arith.extui %0 : i1 to i32
    %c0_i32_0 = arith.constant 0 : i32
    %2 = arith.cmpi ne, %1, %c0_i32_0 : i32
    scf.if %2 {
      %c0_27 = arith.constant 0 : index
      %c0_28 = arith.constant 0 : index
      %39 = vector.load %arg4[%c0_27, %c0_28] : memref<2x128xf32, #tpu.memory_space<vmem>>, vector<2x128xf32>
      %c0_29 = arith.constant 0 : index
      %c0_30 = arith.constant 0 : index
      %40 = vector.load %arg7[%c0_29, %c0_30] : memref<2x128xf32, #tpu.memory_space<vmem>>, vector<2x128xf32>
      tpu.vector_store %arg7[%c0_29, %c0_30], %39 {strides = array<i32>} : memref<2x128xf32, #tpu.memory_space<vmem>>, vector<2x128xf32>,
      %c0_31 = arith.constant 0 : index
      %c0_32 = arith.constant 0 : index
      %41 = vector.load %arg5[%c0_31, %c0_32] : memref<2x128xf32, #tpu.memory_space<vmem>>, vector<2x128xf32>
      %c0_33 = arith.constant 0 : index
      %c0_34 = arith.constant 0 : index
      %42 = vector.load %arg8[%c0_33, %c0_34] : memref<2x128xf32, #tpu.memory_space<vmem>>, vector<2x128xf32>
      tpu.vector_store %arg8[%c0_33, %c0_34], %41 {strides = array<i32>} : memref<2x128xf32, #tpu.memory_space<vmem>>, vector<2x128xf32>,
    } else {
    }
    %c0 = arith.constant 0 : index
    %c0_1 = arith.constant 0 : index
    %c0_2 = arith.constant 0 : index
    %3 = vector.load %arg1[%c0, %c0_1, %c0_2] : memref<1x2x128xbf16, #tpu.memory_space<vmem>>, vector<1x2x128xbf16>
    %4 = vector.shape_cast %3 : vector<1x2x128xbf16> to vector<2x128xbf16>
    %c0_3 = arith.constant 0 : index
    %c0_4 = arith.constant 0 : index
    %5 = vector.load %arg2[%c0_3, %c0_4] : memref<128x128xbf16, #tpu.memory_space<vmem>>, vector<128x128xbf16>
    %cst = arith.constant dense<0.000000e+00> : vector<2x128xf32>
    %6 = tpu.matmul %4, %5, %cst {dimension_numbers = #tpu.dot_dimension_numbers<[1], [0], [0], [1], [0, 0, 1, 1], [], []>} : vector<2x128xbf16>, vector<128x128xbf16>, vector<2x128xf32> -> vector<2x128xf32>
    %c0_5 = arith.constant 0 : index
    %c0_6 = arith.constant 0 : index
    %7 = vector.load %arg7[%c0_5, %c0_6] : memref<2x128xf32, #tpu.memory_space<vmem>>, vector<2x128xf32>
    %cst_7 = arith.constant 8.000000e-01 : f32
    %8 = vector.broadcast %cst_7 : f32 to vector<2x128xf32>
    %9 = arith.mulf %8, %7 : vector<2x128xf32>
    %cst_8 = arith.constant 1.000000e-01 : f32
    %10 = vector.broadcast %cst_8 : f32 to vector<2x128xf32>
    %11 = arith.mulf %10, %6 : vector<2x128xf32>
    %12 = arith.addf %9, %11 : vector<2x128xf32>
    %cst_9 = arith.constant 5.000000e-01 : f32
    %13 = vector.broadcast %cst_9 : f32 to vector<2x128xf32>
    %14 = arith.cmpf ogt, %12, %13 : vector<2x128xf32>
    %cst_10 = arith.constant 0.000000e+00 : f32
    %15 = vector.broadcast %cst_10 : f32 to vector<2x128xf32>
    %16 = arith.select %14, %15, %12 : vector<2x128xi1>, vector<2x128xf32>
    %c0_11 = arith.constant 0 : index
    %c0_12 = arith.constant 0 : index
    %17 = vector.load %arg7[%c0_11, %c0_12] : memref<2x128xf32, #tpu.memory_space<vmem>>, vector<2x128xf32>
    tpu.vector_store %arg7[%c0_11, %c0_12], %16 {strides = array<i32>} : memref<2x128xf32, #tpu.memory_space<vmem>>, vector<2x128xf32>,
    %18 = arith.extui %14 : vector<2x128xi1> to vector<2x128xi32>
    %19 = arith.sitofp %18 : vector<2x128xi32> to vector<2x128xf32>
    %20 = arith.truncf %19 : vector<2x128xf32> to vector<2x128xbf16>
    %c0_13 = arith.constant 0 : index
    %c0_14 = arith.constant 0 : index
    %21 = vector.load %arg3[%c0_13, %c0_14] : memref<128x128xbf16, #tpu.memory_space<vmem>>, vector<128x128xbf16>
    %cst_15 = arith.constant dense<0.000000e+00> : vector<2x128xf32>
    %22 = tpu.matmul %20, %21, %cst_15 {dimension_numbers = #tpu.dot_dimension_numbers<[1], [0], [0], [1], [0, 0, 1, 1], [], []>} : vector<2x128xbf16>, vector<128x128xbf16>, vector<2x128xf32> -> vector<2x128xf32>
    %c0_16 = arith.constant 0 : index
    %c0_17 = arith.constant 0 : index
    %23 = vector.load %arg8[%c0_16, %c0_17] : memref<2x128xf32, #tpu.memory_space<vmem>>, vector<2x128xf32>
    %cst_18 = arith.constant 8.000000e-01 : f32
    %24 = vector.broadcast %cst_18 : f32 to vector<2x128xf32>
    %25 = arith.mulf %24, %23 : vector<2x128xf32>
    %cst_19 = arith.constant 1.000000e-01 : f32
    %26 = vector.broadcast %cst_19 : f32 to vector<2x128xf32>
    %27 = arith.mulf %26, %22 : vector<2x128xf32>
    %28 = arith.addf %25, %27 : vector<2x128xf32>
    %cst_20 = arith.constant 1.000000e+01 : f32
    %29 = vector.broadcast %cst_20 : f32 to vector<2x128xf32>
    %30 = arith.cmpf ogt, %28, %29 : vector<2x128xf32>
    %cst_21 = arith.constant 0.000000e+00 : f32
    %31 = vector.broadcast %cst_21 : f32 to vector<2x128xf32>
    %32 = arith.select %30, %31, %28 : vector<2x128xi1>, vector<2x128xf32>
    %c0_22 = arith.constant 0 : index
    %c0_23 = arith.constant 0 : index
    %33 = vector.load %arg8[%c0_22, %c0_23] : memref<2x128xf32, #tpu.memory_space<vmem>>, vector<2x128xf32>
    tpu.vector_store %arg8[%c0_22, %c0_23], %32 {strides = array<i32>} : memref<2x128xf32, #tpu.memory_space<vmem>>, vector<2x128xf32>,
    %34 = arith.extui %30 : vector<2x128xi1> to vector<2x128xi32>
    %35 = arith.sitofp %34 : vector<2x128xi32> to vector<2x128xf32>
    %c0_24 = arith.constant 0 : index
    %c0_25 = arith.constant 0 : index
    %c0_26 = arith.constant 0 : index
    %36 = vector.load %arg6[%c0_24, %c0_25, %c0_26] : memref<1x2x128xf32, #tpu.memory_space<vmem>>, vector<1x2x128xf32>
    %37 = vector.shape_cast %36 : vector<1x2x128xf32> to vector<2x128xf32>
    %38 = vector.shape_cast %35 : vector<2x128xf32> to vector<1x2x128xf32>
    tpu.vector_store %arg6[%c0_24, %c0_25, %c0_26], %38 {strides = array<i32>} : memref<1x2x128xf32, #tpu.memory_space<vmem>>, vector<1x2x128xf32>,
    return
  }
  func.func @transform_0(%arg0: i32) -> (i32, i32, i32) {
    %c0_i32 = arith.constant 0 : i32
    %c0_i32_0 = arith.constant 0 : i32
    %c0_i32_1 = arith.constant 0 : i32
    return %arg0, %c0_i32, %c0_i32_0 : i32, i32, i32
  }
  func.func @transform_1(%arg0: i32) -> (i32, i32) {
    %c0_i32 = arith.constant 0 : i32
    %c0_i32_0 = arith.constant 0 : i32
    %c0_i32_1 = arith.constant 0 : i32
    return %c0_i32, %c0_i32_0 : i32, i32
  }
  func.func @transform_2(%arg0: i32) -> (i32, i32) {
    %c0_i32 = arith.constant 0 : i32
    %c0_i32_0 = arith.constant 0 : i32
    %c0_i32_1 = arith.constant 0 : i32
    return %c0_i32, %c0_i32_0 : i32, i32
  }
  func.func @transform_3(%arg0: i32) -> (i32, i32) {
    %c0_i32 = arith.constant 0 : i32
    %c0_i32_0 = arith.constant 0 : i32
    %c0_i32_1 = arith.constant 0 : i32
    return %c0_i32, %c0_i32_0 : i32, i32
  }
  func.func @transform_4(%arg0: i32) -> (i32, i32) {
    %c0_i32 = arith.constant 0 : i32
    %c0_i32_0 = arith.constant 0 : i32
    %c0_i32_1 = arith.constant 0 : i32
    return %c0_i32, %c0_i32_0 : i32, i32
  }
  func.func @transform_5(%arg0: i32) -> (i32, i32, i32) {
    %c0_i32 = arith.constant 0 : i32
    %c0_i32_0 = arith.constant 0 : i32
    %c0_i32_1 = arith.constant 0 : i32
    return %arg0, %c0_i32, %c0_i32_0 : i32, i32, i32
  }
  func.func @transform_6(%arg0: i32) -> (i32, i32) {
    %c0_i32 = arith.constant 0 : i32
    %c0_i32_0 = arith.constant 0 : i32
    %c0_i32_1 = arith.constant 0 : i32
    return %c0_i32, %c0_i32_0 : i32, i32
  }
  func.func @transform_7(%arg0: i32) -> (i32, i32) {
    %c0_i32 = arith.constant 0 : i32
    %c0_i32_0 = arith.constant 0 : i32
    %c0_i32_1 = arith.constant 0 : i32
    return %c0_i32, %c0_i32_0 : i32, i32
  }
}

</mosaic_0001>

<llo_original>
// kernel: three_layer_snn_forward.1
$region0: #{three_layer_snn_forward.1}
  #allocation0 [shape = 'u32[]', space=smem, size = 0x4, offset = 0x4, fixed_abs, tag = 'smem constant byte address 0x4 - core index']
  #allocation1 [shape = 'u32[144,128]{1,0:T(1,128)}', space=vmem, size = 0x12000, scoped, tag = 'internal scratch']
  %s0 = inlined_call_operand.vmem [shape: bf16[8,2,128], index: 0, kind: input, shape index: {}]
  %s1 = inlined_call_operand.vmem [shape: bf16[128,128], index: 1, kind: input, shape index: {}]
  %s2 = inlined_call_operand.vmem [shape: bf16[128,128], index: 2, kind: input, shape index: {}]
  %s3 = inlined_call_operand.vmem [shape: f32[2,128], index: 3, kind: input, shape index: {}, may-alias: {3,6}]
  %s4 = inlined_call_operand.vmem [shape: f32[2,128], index: 4, kind: input, shape index: {}, may-alias: {4,7}]
  %s5 = inlined_call_operand.hbm [shape: f32[8,2,128], index: 5, kind: output, shape index: {0}]
  %s6 = inlined_call_operand.vmem [shape: f32[2,128], index: 6, kind: output, shape index: {1}, may-alias: {3,6}]
  %s7 = inlined_call_operand.vmem [shape: f32[2,128], index: 7, kind: output, shape index: {2}, may-alias: {4,7}]
  %8 = xla_tuple %s5, %s6, %s7
  %s9 = sld [smem:[#allocation0]]
  $region73: #{three_layer_snn_forward.1} parent=0
    _
  %s11 = ssub.s32 1, %s9
  %s12 = scalar_select 0, %s11, %s9
  $region1: #{three_layer_snn_forward.1} parent=0
    #allocation2 [shape = 'u8[2048]{0}', space=vmem, size = 0x800, scoped, tag = 'output window, operand 0']
    #allocation3 [shape = 's32[2]{0}', space=sflag, size = 0x8, scoped, tag = 'scoped memory for three_layer_snn_forward.1']
    %13 = vsyncpa [#allocation3], 0
    %s14 = scalar_lea.sflag [#allocation3], 1
    %15 = vsyncpa %s14, 0
    loop: start=0, step=1, limit=10
    $region2: #{three_layer_snn_forward.1} parent=1 // loop_pre_header
      _
    $region3: #{three_layer_snn_forward.1} parent=1 // loop_header
      %s17 = sphi 0, %s21
      %p18 = scmp.ge.s32.totalorder %s17, 10
      %s27 = sphi 0, %s29
      %s30 = sphi 0, %s27
      %s31 = sphi 0, %s30
      %s47 = sphi 0, %s31
      %s51 = sphi 0, %s51
      %s53 = sphi 0, %s51
      %s54 = sphi 0, %s53
      %s68 = sphi 0, %s54
      %s72 = sphi 0, %s72
      %s74 = sphi 0, %s72
      %s75 = sphi 0, %s74
      %s89 = sphi 0, %s75
      %s93 = sphi 0, %s93
      %s95 = sphi 0, %s93
      %s96 = sphi 0, %s95
      %s110 = sphi 0, %s96
      %s114 = sphi 0, %s114
      %s116 = sphi 0, %s114
      %s117 = sphi 0, %s116
      %s131 = sphi 0, %s117
      %s137 = sphi 0, %s139
      %s140 = sphi 0, %s137
      %s141 = sphi 0, %s140
      %s157 = sphi 0, %s141
      %s161 = sphi 0, %s161
      %s163 = sphi 0, %s161
      %s164 = sphi 0, %s163
      %s178 = sphi 0, %s164
      %s182 = sphi 0, %s182
      %s184 = sphi 0, %s182
      %s185 = sphi 0, %s184
      %s199 = sphi 0, %s185
    $region4: #{three_layer_snn_forward.1} parent=1 // loop_header_branch
      %20 = sbr.rel (%p18) target = $region8
    $region5: #{three_layer_snn_forward.1} parent=1 // loop_body
      %s22 = ssub.s32 %s17, 1
      %s23 = ssub.s32 %s17, 2
      %s24 = sadd.s32 %s17, 1
      %s25 = ssub.s32 %s17, %s24
      %p26 = scmp.eq.s32.totalorder %s25, 0
      %s28 = sadd.s32 %s27, 1
      %s29 = scalar_select %p26, %s27, %s28
      %p32 = pneg %p26
      %p33 = scmp.eq.s32.totalorder %s17, 7
      %p34 = por %p32, %p33
      %p35 = scmp.ne.s32.totalorder %s27, %s30
      %p36 = scmp.eq.s32.totalorder %s17, 0
      %p37 = por %p35, %p36
      %p38 = scmp.ne.s32.totalorder %s27, %s30
      %p39 = scmp.eq.s32.totalorder %s22, 7
      %p40 = por %p38, %p39
      %p41 = scmp.ne.s32.totalorder %s30, %s31
      %p42 = scmp.eq.s32.totalorder %s22, 0
      %p43 = por %p41, %p42
      %p44 = scmp.ne.s32.totalorder %s30, %s31
      %p45 = scmp.eq.s32.totalorder %s23, 7
      %p46 = por %p44, %p45
      %p48 = scmp.ne.s32.totalorder %s31, %s47
      %p49 = scmp.eq.s32.totalorder %s23, 0
      %p50 = por %p48, %p49
      %s52 = sadd.s32 %s51, 1
      %p55 = scmp.eq.s32.totalorder %s17, 7
      %p56 = scmp.ne.s32.totalorder %s51, %s53
      %p57 = scmp.eq.s32.totalorder %s17, 0
      %p58 = por %p56, %p57
      %p59 = scmp.ne.s32.totalorder %s51, %s53
      %p60 = scmp.eq.s32.totalorder %s22, 7
      %p61 = por %p59, %p60
      %p62 = scmp.ne.s32.totalorder %s53, %s54
      %p63 = scmp.eq.s32.totalorder %s22, 0
      %p64 = por %p62, %p63
      %p65 = scmp.ne.s32.totalorder %s53, %s54
      %p66 = scmp.eq.s32.totalorder %s23, 7
      %p67 = por %p65, %p66
      %p69 = scmp.ne.s32.totalorder %s54, %s68
      %p70 = scmp.eq.s32.totalorder %s23, 0
      %p71 = por %p69, %p70
      %s73 = sadd.s32 %s72, 1
      %p76 = scmp.eq.s32.totalorder %s17, 7
      %p77 = scmp.ne.s32.totalorder %s72, %s74
      %p78 = scmp.eq.s32.totalorder %s17, 0
      %p79 = por %p77, %p78
      %p80 = scmp.ne.s32.totalorder %s72, %s74
      %p81 = scmp.eq.s32.totalorder %s22, 7
      %p82 = por %p80, %p81
      %p83 = scmp.ne.s32.totalorder %s74, %s75
      %p84 = scmp.eq.s32.totalorder %s22, 0
      %p85 = por %p83, %p84
      %p86 = scmp.ne.s32.totalorder %s74, %s75
      %p87 = scmp.eq.s32.totalorder %s23, 7
      %p88 = por %p86, %p87
      %p90 = scmp.ne.s32.totalorder %s75, %s89
      %p91 = scmp.eq.s32.totalorder %s23, 0
      %p92 = por %p90, %p91
      %s94 = sadd.s32 %s93, 1
      %p97 = scmp.eq.s32.totalorder %s17, 7
      %p98 = scmp.ne.s32.totalorder %s93, %s95
      %p99 = scmp.eq.s32.totalorder %s17, 0
      %p100 = por %p98, %p99
      %p101 = scmp.ne.s32.totalorder %s93, %s95
      %p102 = scmp.eq.s32.totalorder %s22, 7
      %p103 = por %p101, %p102
      %p104 = scmp.ne.s32.totalorder %s95, %s96
      %p105 = scmp.eq.s32.totalorder %s22, 0
      %p106 = por %p104, %p105
      %p107 = scmp.ne.s32.totalorder %s95, %s96
      %p108 = scmp.eq.s32.totalorder %s23, 7
      %p109 = por %p107, %p108
      %p111 = scmp.ne.s32.totalorder %s96, %s110
      %p112 = scmp.eq.s32.totalorder %s23, 0
      %p113 = por %p111, %p112
      %s115 = sadd.s32 %s114, 1
      %p118 = scmp.eq.s32.totalorder %s17, 7
      %p119 = scmp.ne.s32.totalorder %s114, %s116
      %p120 = scmp.eq.s32.totalorder %s17, 0
      %p121 = por %p119, %p120
      %p122 = scmp.ne.s32.totalorder %s114, %s116
      %p123 = scmp.eq.s32.totalorder %s22, 7
      %p124 = por %p122, %p123
      %p125 = scmp.ne.s32.totalorder %s116, %s117
      %p126 = scmp.eq.s32.totalorder %s22, 0
      %p127 = por %p125, %p126
      %p128 = scmp.ne.s32.totalorder %s116, %s117
      %p129 = scmp.eq.s32.totalorder %s23, 7
      %p130 = por %p128, %p129
      %p132 = scmp.ne.s32.totalorder %s117, %s131
      %p133 = scmp.eq.s32.totalorder %s23, 0
      %p134 = por %p132, %p133
      %s135 = ssub.s32 %s17, %s24
      %p136 = scmp.eq.s32.totalorder %s135, 0
      %s138 = sadd.s32 %s137, 1
      %s139 = scalar_select %p136, %s137, %s138
      %p142 = pneg %p136
      %p143 = scmp.eq.s32.totalorder %s17, 7
      %p144 = por %p142, %p143
      %p145 = scmp.ne.s32.totalorder %s137, %s140
      %p146 = scmp.eq.s32.totalorder %s17, 0
      %p147 = por %p145, %p146
      %p148 = scmp.ne.s32.totalorder %s137, %s140
      %p149 = scmp.eq.s32.totalorder %s22, 7
      %p150 = por %p148, %p149
      %p151 = scmp.ne.s32.totalorder %s140, %s141
      %p152 = scmp.eq.s32.totalorder %s22, 0
      %p153 = por %p151, %p152
      %p154 = scmp.ne.s32.totalorder %s140, %s141
      %p155 = scmp.eq.s32.totalorder %s23, 7
      %p156 = por %p154, %p155
      %p158 = scmp.ne.s32.totalorder %s141, %s157
      %p159 = scmp.eq.s32.totalorder %s23, 0
      %p160 = por %p158, %p159
      %s162 = sadd.s32 %s161, 1
      %p165 = scmp.eq.s32.totalorder %s17, 7
      %p166 = scmp.ne.s32.totalorder %s161, %s163
      %p167 = scmp.eq.s32.totalorder %s17, 0
      %p168 = por %p166, %p167
      %p169 = scmp.ne.s32.totalorder %s161, %s163
      %p170 = scmp.eq.s32.totalorder %s22, 7
      %p171 = por %p169, %p170
      %p172 = scmp.ne.s32.totalorder %s163, %s164
      %p173 = scmp.eq.s32.totalorder %s22, 0
      %p174 = por %p172, %p173
      %p175 = scmp.ne.s32.totalorder %s163, %s164
      %p176 = scmp.eq.s32.totalorder %s23, 7
      %p177 = por %p175, %p176
      %p179 = scmp.ne.s32.totalorder %s164, %s178
      %p180 = scmp.eq.s32.totalorder %s23, 0
      %p181 = por %p179, %p180
      %s183 = sadd.s32 %s182, 1
      %p186 = scmp.eq.s32.totalorder %s17, 7
      %p187 = scmp.ne.s32.totalorder %s182, %s184
      %p188 = scmp.eq.s32.totalorder %s17, 0
      %p189 = por %p187, %p188
      %p190 = scmp.ne.s32.totalorder %s182, %s184
      %p191 = scmp.eq.s32.totalorder %s22, 7
      %p192 = por %p190, %p191
      %p193 = scmp.ne.s32.totalorder %s184, %s185
      %p194 = scmp.eq.s32.totalorder %s22, 0
      %p195 = por %p193, %p194
      %p196 = scmp.ne.s32.totalorder %s184, %s185
      %p197 = scmp.eq.s32.totalorder %s23, 7
      %p198 = por %p196, %p197
      %p200 = scmp.ne.s32.totalorder %s185, %s199
      %p201 = scmp.eq.s32.totalorder %s23, 0
      %p202 = por %p200, %p201
      %p203 = scmp.le.s32.totalorder 1, %s17
      %p204 = scmp.lt.s32.totalorder %s17, 9
      %p205 = pnand %p203, %p204
      %p206 = pneg %p205
      // Predicated region
      $region9: #{three_layer_snn_forward.1} parent=5 // pred_check
        _
      $region10: #{three_layer_snn_forward.1} parent=5 // pred_check_branch
        %208 = sbr.rel (%p205) target = $region12
      $region11: #{three_layer_snn_forward.1} parent=5 // pred_region
        %s209 = ssub.s32 %s17, 1
        // Predicated region
        $region13: #{three_layer_snn_forward.1} parent=11 // pred_check
          %p210 = pneg %p64
        $region14: #{three_layer_snn_forward.1} parent=11 // pred_check_branch
          %212 = sbr.rel (%p210) target = $region16
        $region15: #{three_layer_snn_forward.1} parent=11 // pred_region
          _
        $region16: #{three_layer_snn_forward.1} parent=11 // pred_fallthru
          _
        // Predicated region
        $region17: #{three_layer_snn_forward.1} parent=11 // pred_check
          %p213 = pneg %p85
        $region18: #{three_layer_snn_forward.1} parent=11 // pred_check_branch
          %215 = sbr.rel (%p213) target = $region20
        $region19: #{three_layer_snn_forward.1} parent=11 // pred_region
          _
        $region20: #{three_layer_snn_forward.1} parent=11 // pred_fallthru
          _
        // Predicated region
        $region21: #{three_layer_snn_forward.1} parent=11 // pred_check
          %p216 = pneg %p106
        $region22: #{three_layer_snn_forward.1} parent=11 // pred_check_branch
          %218 = sbr.rel (%p216) target = $region24
        $region23: #{three_layer_snn_forward.1} parent=11 // pred_region
          _
        $region24: #{three_layer_snn_forward.1} parent=11 // pred_fallthru
          _
        // Predicated region
        $region25: #{three_layer_snn_forward.1} parent=11 // pred_check
          %p219 = pneg %p127
        $region26: #{three_layer_snn_forward.1} parent=11 // pred_check_branch
          %221 = sbr.rel (%p219) target = $region28
        $region27: #{three_layer_snn_forward.1} parent=11 // pred_region
          _
        $region28: #{three_layer_snn_forward.1} parent=11 // pred_fallthru
          _
      $region12: #{three_layer_snn_forward.1} parent=5 // pred_fallthru
        _
      %p222 = scmp.lt.s32.totalorder %s17, 8
      // Predicated region
      $region29: #{three_layer_snn_forward.1} parent=5 // pred_check
        %p223 = pneg %p222
      $region30: #{three_layer_snn_forward.1} parent=5 // pred_check_branch
        %225 = sbr.rel (%p223) target = $region32
      $region31: #{three_layer_snn_forward.1} parent=5 // pred_region
        // Predicated region
        $region33: #{three_layer_snn_forward.1} parent=31 // pred_check
          %p226 = pneg %p37
        $region34: #{three_layer_snn_forward.1} parent=31 // pred_check_branch
          %228 = sbr.rel (%p226) target = $region36
        $region35: #{three_layer_snn_forward.1} parent=31 // pred_region
          %p229 = scmp.lt.s32.totalorder %s17, 7
          %s230 = scalar_select %p229, %s17, 7
          %s231 = scalar_lea.vmem %s0, %s230
        $region36: #{three_layer_snn_forward.1} parent=31 // pred_fallthru
          _
      $region32: #{three_layer_snn_forward.1} parent=5 // pred_fallthru
        _
      %p232 = scmp.le.s32.totalorder 1, %s17
      %p233 = scmp.lt.s32.totalorder %s17, 9
      %p234 = pnand %p232, %p233
      %p235 = pneg %p234
      // Predicated region
      $region37: #{three_layer_snn_forward.1} parent=5 // pred_check
        _
      $region38: #{three_layer_snn_forward.1} parent=5 // pred_check_branch
        %237 = sbr.rel (%p234) target = $region40
      $region39: #{three_layer_snn_forward.1} parent=5 // pred_region
        %s238 = ssub.s32 %s17, 1
        %p239 = scmp.lt.s32.totalorder %s22, 7
        %s240 = scalar_select %p239, %s22, 7
        %s241 = scalar_lea.vmem %s0, %s240
        %p242 = pneg %p43
        %p243 = pneg %p40
        %p244 = pneg %p64
        %p245 = pneg %p61
        %p246 = pneg %p85
        %p247 = pneg %p82
        %p248 = pneg %p106
        %p249 = pneg %p103
        %p250 = pneg %p127
        %p251 = pneg %p124
        %p252 = pneg %p153
        %p253 = pneg %p150
        %s254 = sand.u32 %s140, 1
        %s255 = scalar_lea.sflag [#allocation3], %s254
        %s256 = sand.u32 %s140, 1
        %s257 = smul.addr %s256, 2
        %s258 = scalar_lea.vmem [#allocation2], %s257
        %p259 = pneg %p174
        %p260 = pneg %p171
        %p261 = pneg %p195
        %p262 = pneg %p192
        %p263 = scmp.lt.s32.totalorder %s22, 7
        %s264 = scalar_select %p263, %s22, 7
        %s265 = scalar_lea.vmem %s0, %s264
        %p267 = scmp.eq.s32.totalorder %s22, 0
        // Predicated region
        $region41: #{three_layer_snn_forward.1} parent=39 // pred_check
          %p268 = pneg %p267
        $region42: #{three_layer_snn_forward.1} parent=39 // pred_check_branch
          %270 = sbr.rel (%p268) target = $region44
        $region43: #{three_layer_snn_forward.1} parent=39 // pred_region
          %v271 = vld [vmem:[%s3] sm:$0x3]
          %272 = vst [vmem:[%s6] sm:$0x3] %v271
          %v273 = vld [vmem:[%s4] sm:$0x3]
          %274 = vst [vmem:[%s7] sm:$0x3] %v273
        $region44: #{three_layer_snn_forward.1} parent=39 // pred_fallthru
          _
        %v275 = vld [vmem:[%s265] sm:$0x1]
        %v276 = vld [vmem:[%s1] sm:$0xf]
        %v277 = vld [vmem:[%s1 + $0x4] sm:$0xf]
        %v278 = vld [vmem:[%s1 + $0x8] sm:$0xf]
        %v279 = vld [vmem:[%s1 + $0xc] sm:$0xf]
        %v280 = vld [vmem:[%s1 + $0x10] sm:$0xf]
        %v281 = vld [vmem:[%s1 + $0x14] sm:$0xf]
        %v282 = vld [vmem:[%s1 + $0x18] sm:$0xf]
        %v283 = vld [vmem:[%s1 + $0x1c] sm:$0xf]
        %v284 = vld [vmem:[%s1 + $0x20] sm:$0xf]
        %v285 = vld [vmem:[%s1 + $0x24] sm:$0xf]
        %v286 = vld [vmem:[%s1 + $0x28] sm:$0xf]
        %v287 = vld [vmem:[%s1 + $0x2c] sm:$0xf]
        %v288 = vld [vmem:[%s1 + $0x30] sm:$0xf]
        %v289 = vld [vmem:[%s1 + $0x34] sm:$0xf]
        %v290 = vld [vmem:[%s1 + $0x38] sm:$0xf]
        %v291 = vld [vmem:[%s1 + $0x3c] sm:$0xf]
        %v308 = vunpack.c.l.b16 %v276
        %v309 = vunpack.c.l.b16 %v277
        %v310 = vunpack.c.l.b16 %v278
        %v311 = vunpack.c.l.b16 %v279
        %v312 = vunpack.c.l.b16 %v280
        %v313 = vunpack.c.l.b16 %v281
        %v314 = vunpack.c.l.b16 %v282
        %v315 = vunpack.c.l.b16 %v283
        %v316 = vunpack.c.l.b16 %v284
        %v317 = vunpack.c.l.b16 %v285
        %v318 = vunpack.c.l.b16 %v286
        %v319 = vunpack.c.l.b16 %v287
        %v320 = vunpack.c.l.b16 %v288
        %v321 = vunpack.c.l.b16 %v289
        %v322 = vunpack.c.l.b16 %v290
        %v323 = vunpack.c.l.b16 %v291
        %v324 = vpack.c.b16 %v309, %v308
        %v325 = vpack.c.b16 %v311, %v310
        %v326 = vpack.c.b16 %v313, %v312
        %v327 = vpack.c.b16 %v315, %v314
        %v328 = vpack.c.b16 %v317, %v316
        %v329 = vpack.c.b16 %v319, %v318
        %v330 = vpack.c.b16 %v321, %v320
        %v331 = vpack.c.b16 %v323, %v322
        %340 = vmatprep.subr.bf16.mxu0 0
        %341 = vmatpush1.bf16.msra.mxu0 %v324
        %342 = vmatprep.subr.bf16.mxu0 0
        %343 = vmatpush1.bf16.msra.mxu0 %v325
        %344 = vmatprep.subr.bf16.mxu0 0
        %345 = vmatpush1.bf16.msra.mxu0 %v326
        %346 = vmatprep.subr.bf16.mxu0 0
        %347 = vmatpush1.bf16.msra.mxu0 %v327
        %348 = vmatprep.subr.bf16.mxu0 0
        %349 = vmatpush1.bf16.msra.mxu0 %v328
        %350 = vmatprep.subr.bf16.mxu0 0
        %351 = vmatpush1.bf16.msra.mxu0 %v329
        %352 = vmatprep.subr.bf16.mxu0 0
        %353 = vmatpush1.bf16.msra.mxu0 %v330
        %354 = vmatprep.subr.bf16.mxu0 0
        %355 = vmatpush1.bf16.msra.mxu0 %v331
        %356 = vmatprep.subr.bf16.mxu0 0
        %357 = vmatpush1.bf16.msra.mxu0 0
        %358 = vmatprep.subr.bf16.mxu0 0
        %359 = vmatpush1.bf16.msra.mxu0 0
        %360 = vmatprep.subr.bf16.mxu0 0
        %361 = vmatpush1.bf16.msra.mxu0 0
        %362 = vmatprep.subr.bf16.mxu0 0
        %363 = vmatpush1.bf16.msra.mxu0 0
        %364 = vmatprep.subr.bf16.mxu0 0
        %365 = vmatpush1.bf16.msra.mxu0 0
        %366 = vmatprep.subr.bf16.mxu0 0
        %367 = vmatpush1.bf16.msra.mxu0 0
        %368 = vmatprep.subr.bf16.mxu0 0
        %369 = vmatpush1.bf16.msra.mxu0 0
        %370 = vmatprep.subr.bf16.mxu0 0
        %371 = vmatpush1.bf16.msra.mxu0 0
        %372 = vmatprep.mubr.bf16.mxu0 0
        %373 = vmatmul.mubr.bf16.gmra.mrb[0].mxu0 %v275
        %v374 = vpop.f32.mrb[0].mxu0
        %v375 = vadd.f32 0.0, %v374
        %v376 = vpop.f32.mrb[0].mxu0
        %v377 = vpop.f32.mrb[0].mxu0
        %v378 = vpop.f32.mrb[0].mxu0
        %379 = vdwg.mxu0
        %v380 = vld [vmem:[%s6] sm:$0x3]
        %v381 = vmul.f32 %v380, 0.8
        %v382 = vmul.f32 %v375, 0.1
        %v383 = vadd.f32 %v381, %v382
        %vm384 = vcmp.gt.f32.partialorder %v383, 0.5
        %v385 = vsel %vm384, 0.0, %v383
        %386 = vst [vmem:[%s6] sm:$0x3] %v385
        %v387 = vsel %vm384, 1, 0
        %v388 = vcvt.s32.f32 %v387
        %v389 = vpack.c.bf16 %v388, %v388
        %v390 = vld [vmem:[%s2] sm:$0xf]
        %v391 = vld [vmem:[%s2 + $0x4] sm:$0xf]
        %v392 = vld [vmem:[%s2 + $0x8] sm:$0xf]
        %v393 = vld [vmem:[%s2 + $0xc] sm:$0xf]
        %v394 = vld [vmem:[%s2 + $0x10] sm:$0xf]
        %v395 = vld [vmem:[%s2 + $0x14] sm:$0xf]
        %v396 = vld [vmem:[%s2 + $0x18] sm:$0xf]
        %v397 = vld [vmem:[%s2 + $0x1c] sm:$0xf]
        %v398 = vld [vmem:[%s2 + $0x20] sm:$0xf]
        %v399 = vld [vmem:[%s2 + $0x24] sm:$0xf]
        %v400 = vld [vmem:[%s2 + $0x28] sm:$0xf]
        %v401 = vld [vmem:[%s2 + $0x2c] sm:$0xf]
        %v402 = vld [vmem:[%s2 + $0x30] sm:$0xf]
        %v403 = vld [vmem:[%s2 + $0x34] sm:$0xf]
        %v404 = vld [vmem:[%s2 + $0x38] sm:$0xf]
        %v405 = vld [vmem:[%s2 + $0x3c] sm:$0xf]
        %v422 = vunpack.c.l.b16 %v390
        %v423 = vunpack.c.l.b16 %v391
        %v424 = vunpack.c.l.b16 %v392
        %v425 = vunpack.c.l.b16 %v393
        %v426 = vunpack.c.l.b16 %v394
        %v427 = vunpack.c.l.b16 %v395
        %v428 = vunpack.c.l.b16 %v396
        %v429 = vunpack.c.l.b16 %v397
        %v430 = vunpack.c.l.b16 %v398
        %v431 = vunpack.c.l.b16 %v399
        %v432 = vunpack.c.l.b16 %v400
        %v433 = vunpack.c.l.b16 %v401
        %v434 = vunpack.c.l.b16 %v402
        %v435 = vunpack.c.l.b16 %v403
        %v436 = vunpack.c.l.b16 %v404
        %v437 = vunpack.c.l.b16 %v405
        %v438 = vpack.c.b16 %v423, %v422
        %v439 = vpack.c.b16 %v425, %v424
        %v440 = vpack.c.b16 %v427, %v426
        %v441 = vpack.c.b16 %v429, %v428
        %v442 = vpack.c.b16 %v431, %v430
        %v443 = vpack.c.b16 %v433, %v432
        %v444 = vpack.c.b16 %v435, %v434
        %v445 = vpack.c.b16 %v437, %v436
        %454 = vmatprep.subr.bf16.mxu0 0
        %455 = vmatpush1.bf16.msra.mxu0 %v438
        %456 = vmatprep.subr.bf16.mxu0 0
        %457 = vmatpush1.bf16.msra.mxu0 %v439
        %458 = vmatprep.subr.bf16.mxu0 0
        %459 = vmatpush1.bf16.msra.mxu0 %v440
        %460 = vmatprep.subr.bf16.mxu0 0
        %461 = vmatpush1.bf16.msra.mxu0 %v441
        %462 = vmatprep.subr.bf16.mxu0 0
        %463 = vmatpush1.bf16.msra.mxu0 %v442
        %464 = vmatprep.subr.bf16.mxu0 0
        %465 = vmatpush1.bf16.msra.mxu0 %v443
        %466 = vmatprep.subr.bf16.mxu0 0
        %467 = vmatpush1.bf16.msra.mxu0 %v444
        %468 = vmatprep.subr.bf16.mxu0 0
        %469 = vmatpush1.bf16.msra.mxu0 %v445
        %470 = vmatprep.subr.bf16.mxu0 0
        %471 = vmatpush1.bf16.msra.mxu0 0
        %472 = vmatprep.subr.bf16.mxu0 0
        %473 = vmatpush1.bf16.msra.mxu0 0
        %474 = vmatprep.subr.bf16.mxu0 0
        %475 = vmatpush1.bf16.msra.mxu0 0
        %476 = vmatprep.subr.bf16.mxu0 0
        %477 = vmatpush1.bf16.msra.mxu0 0
        %478 = vmatprep.subr.bf16.mxu0 0
        %479 = vmatpush1.bf16.msra.mxu0 0
        %480 = vmatprep.subr.bf16.mxu0 0
        %481 = vmatpush1.bf16.msra.mxu0 0
        %482 = vmatprep.subr.bf16.mxu0 0
        %483 = vmatpush1.bf16.msra.mxu0 0
        %484 = vmatprep.subr.bf16.mxu0 0
        %485 = vmatpush1.bf16.msra.mxu0 0
        %486 = vmatprep.mubr.bf16.mxu0 0
        %487 = vmatmul.mubr.bf16.gmra.mrb[0].mxu0 %v389
        %v488 = vpop.f32.mrb[0].mxu0
        %v489 = vadd.f32 0.0, %v488
        %v490 = vpop.f32.mrb[0].mxu0
        %v491 = vpop.f32.mrb[0].mxu0
        %v492 = vpop.f32.mrb[0].mxu0
        %493 = vdwg.mxu0
        %v494 = vld [vmem:[%s7] sm:$0x3]
        %v495 = vmul.f32 %v494, 0.8
        %v496 = vmul.f32 %v489, 0.1
        %v497 = vadd.f32 %v495, %v496
        %vm498 = vcmp.gt.f32.partialorder %v497, 10.0
        %v499 = vsel %vm498, 0.0, %v497
        %500 = vst [vmem:[%s7] sm:$0x3] %v499
        %v501 = vsel %vm498, 1, 0
        %v502 = vcvt.s32.f32 %v501
        %503 = vst [vmem:[%s258] sm:$0x3] %v502
        %s504 = sand.u32 %s140, 1
        %s505 = scalar_lea.sflag [#allocation3], %s504
        %s506 = sand.u32 %s140, 1
        %s507 = smul.addr %s506, 2
        %s508 = scalar_lea.vmem [#allocation2], %s507
        // Predicated region
        $region45: #{three_layer_snn_forward.1} parent=39 // pred_check
          %p509 = pneg %p150
        $region46: #{three_layer_snn_forward.1} parent=39 // pred_check_branch
          %511 = sbr.rel (%p509) target = $region48
        $region47: #{three_layer_snn_forward.1} parent=39 // pred_region
          %s513 = ssub.s32 32, 32
          %514 = vsyncadd %s505, %s513
          %s515 = smul.addr %s22, 32
          %s516 = scalar_lea.hbm %s5, %s515
          %s518 = sshll.u32 %s508, 4
          %s519 = int_to_ptr.vmem [resolvable:$true] %s518
          %521 = dma.vmem_to_hbm [thread:$0]  %s519, 32, %s516, %s505
        $region48: #{three_layer_snn_forward.1} parent=39 // pred_fallthru
          _
        // Predicated region
        $region49: #{three_layer_snn_forward.1} parent=39 // pred_check
          %p522 = pneg %p171
        $region50: #{three_layer_snn_forward.1} parent=39 // pred_check_branch
          %524 = sbr.rel (%p522) target = $region52
        $region51: #{three_layer_snn_forward.1} parent=39 // pred_region
          _
        $region52: #{three_layer_snn_forward.1} parent=39 // pred_fallthru
          _
        // Predicated region
        $region53: #{three_layer_snn_forward.1} parent=39 // pred_check
          %p525 = pneg %p192
        $region54: #{three_layer_snn_forward.1} parent=39 // pred_check_branch
          %527 = sbr.rel (%p525) target = $region56
        $region55: #{three_layer_snn_forward.1} parent=39 // pred_region
          _
        $region56: #{three_layer_snn_forward.1} parent=39 // pred_fallthru
          _
        // Predicated region
        $region57: #{three_layer_snn_forward.1} parent=39 // pred_check
          %p528 = pneg %p171
        $region58: #{three_layer_snn_forward.1} parent=39 // pred_check_branch
          %530 = sbr.rel (%p528) target = $region60
        $region59: #{three_layer_snn_forward.1} parent=39 // pred_region
          _
        $region60: #{three_layer_snn_forward.1} parent=39 // pred_fallthru
          _
        // Predicated region
        $region61: #{three_layer_snn_forward.1} parent=39 // pred_check
          %p531 = pneg %p192
        $region62: #{three_layer_snn_forward.1} parent=39 // pred_check_branch
          %533 = sbr.rel (%p531) target = $region64
        $region63: #{three_layer_snn_forward.1} parent=39 // pred_region
          _
        $region64: #{three_layer_snn_forward.1} parent=39 // pred_fallthru
          _
      $region40: #{three_layer_snn_forward.1} parent=5 // pred_fallthru
        _
      %p534 = scmp.le.s32.totalorder 2, %s17
      // Predicated region
      $region65: #{three_layer_snn_forward.1} parent=5 // pred_check
        %p535 = pneg %p534
      $region66: #{three_layer_snn_forward.1} parent=5 // pred_check_branch
        %537 = sbr.rel (%p535) target = $region68
      $region67: #{three_layer_snn_forward.1} parent=5 // pred_region
        %s538 = ssub.s32 %s17, 2
        // Predicated region
        $region69: #{three_layer_snn_forward.1} parent=67 // pred_check
          %p539 = pneg %p156
        $region70: #{three_layer_snn_forward.1} parent=67 // pred_check_branch
          %541 = sbr.rel (%p539) target = $region72
        $region71: #{three_layer_snn_forward.1} parent=67 // pred_region
          %s542 = sand.u32 %s141, 1
          %s543 = scalar_lea.sflag [#allocation3], %s542
          %s544 = sand.u32 %s141, 1
          %s545 = smul.addr %s544, 2
          %s546 = scalar_lea.vmem [#allocation2], %s545
          %547 = dma.done %s543, 32
        $region72: #{three_layer_snn_forward.1} parent=67 // pred_fallthru
          _
      $region68: #{three_layer_snn_forward.1} parent=5 // pred_fallthru
        _
    $region6: #{three_layer_snn_forward.1} parent=1 // loop_footer
      %s21 = sadd.s32 1, %s17
    $region7: #{three_layer_snn_forward.1} parent=1 // loop_footer_branch
      %16 = sbr.rel target = $region3
    $region8: #{three_layer_snn_forward.1} parent=1 // loop_exit
      _
    %548 = vsyncpa [#allocation3], 1
    %s549 = scalar_lea.sflag [#allocation3], 1
    %550 = vsyncpa %s549, 1

</llo_original>
